<compile_context>
chip_gen: v5e
topology: v5e:2x2
jax: 0.10.0
libtpu: 0.0.40
codegen_flags: <defaults>
</compile_context>

<pallas_src>
import jax
import jax.numpy as jnp
from jax.experimental import pallas as pl
from jax.experimental.pallas import tpu as pltpu

LANES = 128                  # vreg lane width
SUBLANES = 8                 # vreg sublane depth (min f32 row granularity)
ALIGN = SUBLANES * LANES     # 1024: alignment of the Pallas-processed prefix
TILE_R = 4096                # rows per tile -> 4096*128*4B = 2 MiB per buffer
# Below this element count, launch/DMA-setup overhead dominates: use plain XLA.
PALLAS_MIN_ELEMS = 32 * 1024


def linear_kernel(w_ref, b_ref, x_ref, o_ref):
    # w_ref, b_ref: (1, 1) SMEM scalars; x_ref/o_ref: (tile_r, 128) VMEM tiles
    # of the lane-dense slab. One fused multiply-add per vreg.
    o_ref[...] = x_ref[...] * w_ref[0, 0] + b_ref[0, 0]


def _round_up(v, m):
    return ((v + m - 1) // m) * m


def _run_tiles(x2, w_s, b_s):
    """Run the affine kernel over a lane-dense (rows, 128) f32 slab.

    rows is a multiple of SUBLANES by construction.
    """
    rows = x2.shape[0]
    # Clamp tile_r so the grid has >= 2 steps when possible (keeps both v7x
    # TensorCores busy via the "parallel" dimension semantics); tile_r stays a
    # multiple of 8 so every block is (8,128)-aligned.
    tile_r = min(TILE_R, max(SUBLANES, _round_up(pl.cdiv(rows, 2), SUBLANES)))
    grid = (pl.cdiv(rows, tile_r),)

    return pl.pallas_call(
        linear_kernel,
        out_shape=jax.ShapeDtypeStruct((rows, LANES), jnp.float32),
        grid=grid,
        in_specs=[
            pl.BlockSpec(memory_space=pltpu.SMEM),            # weight scalar
            pl.BlockSpec(memory_space=pltpu.SMEM),            # bias scalar
            pl.BlockSpec((tile_r, LANES), lambda i: (i, 0)),  # x tile
        ],
        out_specs=pl.BlockSpec((tile_r, LANES), lambda i: (i, 0)),
        compiler_params=pltpu.CompilerParams(
            dimension_semantics=("parallel",),   # shard rows across TCs (v7x)
            vmem_limit_bytes=32 * 1024 * 1024,   # ~8 MiB live buffers + headroom
        ),
    )(w_s, b_s, x2)


@jax.jit
def linear_forward_pallas(x, weight, bias):
    """x: (N, 1) f32; weight: (1, 1) f32; bias: (1,) f32 -> (N, 1) f32."""
    n, f = x.shape
    assert f == 1, "LinearModel expects in_features == 1"
    w_s = weight.reshape(1, 1).astype(jnp.float32)
    b_s = bias.reshape(1, 1).astype(jnp.float32)

    xf = jnp.ravel(x).astype(jnp.float32)   # (N,): pure bitcast for f32 input

    main = (n // ALIGN) * ALIGN             # 1024-aligned prefix, Pallas path
    tail = n - main                         # < 1024 trailing elements

    pieces = []
    if main > 0:
        # Copy-free repack: reshape of the aligned prefix (full array when
        # tail == 0) into a lane-dense slab; no jnp.pad anywhere on this path.
        x2 = xf[:main].reshape(main // LANES, LANES)
        y_main = _run_tiles(x2, w_s, b_s).reshape(main)
        pieces.append(y_main)
    if tail > 0:
        if main > 0:
            # Tiny tail: one fused XLA FMA; no extra full-array HBM pass.
            y_tail = xf[main:] * w_s[0, 0] + b_s[0, 0]
        else:
            # No aligned prefix (tiny forced-Pallas input): pad only this
            # small chunk to one (8, 128) tile and run a single-block kernel.
            x2 = jnp.pad(xf, (0, ALIGN - tail)).reshape(SUBLANES, LANES)
            y_tail = _run_tiles(x2, w_s, b_s).reshape(-1)[:tail]
        pieces.append(y_tail)

    y = pieces[0] if len(pieces) == 1 else jnp.concatenate(pieces)
    return y.reshape(n, 1)


def linear_model_forward(x, weight, bias, *, force_pallas=False):
    """Dispatcher: tiny batches are pure launch overhead for Pallas -> XLA."""
    if force_pallas or x.shape[0] >= PALLAS_MIN_ELEMS:
        return linear_forward_pallas(x, weight, bias)
    return x @ weight.T + bias


if __name__ == "__main__":
    key = jax.random.PRNGKey(0)
    kx, kw, kb, kx2, kx3 = jax.random.split(key, 5)

    # Deterministic parameters (mimics nn.Linear(1,1) init range).
    weight = jax.random.uniform(kw, (1, 1), dtype=jnp.float32, minval=-1.0, maxval=1.0)
    bias = jax.random.uniform(kb, (1,), dtype=jnp.float32, minval=-1.0, maxval=1.0)

    # 1) Small shape consistent with the module: batch=8, in_features=1.
    #    Force the Pallas path (single padded (8,128) tile).
    x_small = jax.random.normal(kx, (8, 1), dtype=jnp.float32)
    y_small = jax.block_until_ready(
        linear_model_forward(x_small, weight, bias, force_pallas=True)
    )
    y_small_ref = x_small @ weight.T + bias
    assert y_small.shape == (8, 1)
    assert jnp.allclose(y_small, y_small_ref, atol=1e-6), "small-batch mismatch"

    # 2) Non-aligned batch: exercises aligned-prefix Pallas + XLA tail path
    #    (main=39936 -> rows=312, tile_r clamped so grid has 2 steps).
    x_mid = jax.random.normal(kx2, (40000, 1), dtype=jnp.float32)
    y_mid = jax.block_until_ready(linear_model_forward(x_mid, weight, bias))
    y_mid_ref = x_mid @ weight.T + bias
    assert y_mid.shape == (40000, 1)
    assert jnp.allclose(y_mid, y_mid_ref, atol=1e-6), "mid-batch mismatch"

    # 3) Aligned batch: fully copy-free path, grid of 2 full (4096,128) tiles.
    n_big = 2 * TILE_R * LANES  # 1,048,576 rows
    x_big = jax.random.normal(kx3, (n_big, 1), dtype=jnp.float32)
    y_big = jax.block_until_ready(linear_model_forward(x_big, weight, bias))
    y_big_ref = x_big @ weight.T + bias
    assert y_big.shape == (n_big, 1)
    assert jnp.allclose(y_big, y_big_ref, atol=1e-6), "large-batch mismatch"

    print("KERNEL_OK")
</pallas_src>

<mosaic_0001>
module attributes {stable_mosaic.version = 11 : i64} {
  func.func @linear_kernel(%arg0: i32, %arg1: memref<1x1xf32, #tpu.memory_space<smem>>, %arg2: memref<1x1xf32, #tpu.memory_space<smem>>, %arg3: memref<8x128xf32, #tpu.memory_space<vmem>>, %arg4: memref<8x128xf32, #tpu.memory_space<vmem>>) attributes {dimension_semantics = [#tpu.dimension_semantics<parallel>], iteration_bounds = array<i64: 1>, scalar_prefetch = 0 : i64, scratch_operands = 0 : i64, tpu.core_type = #tpu.core_type<tc>, window_params = [{transform_indices = @transform_0, window_bounds = array<i64: 1, 1>}, {transform_indices = @transform_1, window_bounds = array<i64: 1, 1>}, {transform_indices = @transform_2, window_bounds = array<i64: 8, 128>}, {transform_indices = @transform_3, window_bounds = array<i64: 8, 128>}]} {
    %c0 = arith.constant 0 : index
    %c0_0 = arith.constant 0 : index
    %0 = vector.load %arg3[%c0, %c0_0] : memref<8x128xf32, #tpu.memory_space<vmem>>, vector<8x128xf32>
    %c0_1 = arith.constant 0 : index
    %c0_2 = arith.constant 0 : index
    %1 = memref.load %arg1[%c0_1, %c0_2] : memref<1x1xf32, #tpu.memory_space<smem>>
    %2 = vector.broadcast %1 : f32 to vector<8x128xf32>
    %3 = arith.mulf %0, %2 : vector<8x128xf32>
    %c0_3 = arith.constant 0 : index
    %c0_4 = arith.constant 0 : index
    %4 = memref.load %arg2[%c0_3, %c0_4] : memref<1x1xf32, #tpu.memory_space<smem>>
    %5 = vector.broadcast %4 : f32 to vector<8x128xf32>
    %6 = arith.addf %3, %5 : vector<8x128xf32>
    %c0_5 = arith.constant 0 : index
    %c0_6 = arith.constant 0 : index
    %7 = vector.load %arg4[%c0_5, %c0_6] : memref<8x128xf32, #tpu.memory_space<vmem>>, vector<8x128xf32>
    tpu.vector_store %arg4[%c0_5, %c0_6], %6 {strides = array<i32>} : memref<8x128xf32, #tpu.memory_space<vmem>>, vector<8x128xf32>,
    return
  }
  func.func @transform_0(%arg0: i32) -> (i32, i32) {
    %c0_i32 = arith.constant 0 : i32
    %c0_i32_0 = arith.constant 0 : i32
    %c0_i32_1 = arith.constant 0 : i32
    return %c0_i32, %c0_i32_0 : i32, i32
  }
  func.func @transform_1(%arg0: i32) -> (i32, i32) {
    %c0_i32 = arith.constant 0 : i32
    %c0_i32_0 = arith.constant 0 : i32
    %c0_i32_1 = arith.constant 0 : i32
    return %c0_i32, %c0_i32_0 : i32, i32
  }
  func.func @transform_2(%arg0: i32) -> (i32, i32) {
    %c0_i32 = arith.constant 0 : i32
    %c0_i32_0 = arith.constant 0 : i32
    return %arg0, %c0_i32 : i32, i32
  }
  func.func @transform_3(%arg0: i32) -> (i32, i32) {
    %c0_i32 = arith.constant 0 : i32
    %c0_i32_0 = arith.constant 0 : i32
    return %arg0, %c0_i32 : i32, i32
  }
}

</mosaic_0001>

<llo_original>
// kernel: linear_forward_pallas.1
$region0: #{linear_forward_pallas.1}
  #allocation0 [shape = 'u32[]', space=smem, size = 0x4, offset = 0x4, fixed_abs, tag = 'smem constant byte address 0x4 - core index']
  #allocation1 [shape = 'u32[72,128]{1,0:T(1,128)}', space=vmem, size = 0x9000, scoped, tag = 'internal scratch']
  #allocation2 [shape = 'f32[1,1]{1,0:T(1,128)S(6)}', space=smem, size = 0x200, scoped, tag = 'scoped memory for linear_forward_pallas.1']
  #allocation3 [shape = 'f32[1,1]{1,0:T(1,128)S(6)}', space=smem, size = 0x200, scoped, tag = 'scoped memory for linear_forward_pallas.1']
  %s0 = inlined_call_operand.<no memory space> [shape: f32[1,1], index: 0, kind: input, shape index: {}]
  %s1 = inlined_call_operand.<no memory space> [shape: f32[1,1], index: 1, kind: input, shape index: {}]
  %s2 = inlined_call_operand.vmem [shape: f32[8,128], index: 2, kind: input, shape index: {}]
  %s3 = inlined_call_operand.vmem [shape: f32[8,128], index: 3, kind: output, shape index: {}]
  %s4 = sld [smem:[#allocation0]]
  $region22: #{linear_forward_pallas.1} parent=0
    _
  %s6 = ssub.s32 1, %s4
  %s7 = scalar_select 0, %s6, %s4
  %8 = sst [smem:[#allocation2]] %s0
  %9 = sst [smem:[#allocation3]] %s1
  // Predicated region
  $region2: #{linear_forward_pallas.1} parent=0 // pred_check
    _
  $region3: #{linear_forward_pallas.1} parent=0 // pred_check_branch
    %11 = sbr.rel (0) target = $region5
  $region4: #{linear_forward_pallas.1} parent=0 // pred_region
    _
  $region5: #{linear_forward_pallas.1} parent=0 // pred_fallthru
    _
  // Predicated region
  $region6: #{linear_forward_pallas.1} parent=0 // pred_check
    _
  $region7: #{linear_forward_pallas.1} parent=0 // pred_check_branch
    %13 = sbr.rel (0) target = $region9
  $region8: #{linear_forward_pallas.1} parent=0 // pred_region
    _
  $region9: #{linear_forward_pallas.1} parent=0 // pred_fallthru
    _
  // Predicated region
  $region10: #{linear_forward_pallas.1} parent=0 // pred_check
    _
  $region11: #{linear_forward_pallas.1} parent=0 // pred_check_branch
    %15 = sbr.rel (0) target = $region13
  $region12: #{linear_forward_pallas.1} parent=0 // pred_region
    _
  $region13: #{linear_forward_pallas.1} parent=0 // pred_fallthru
    _
  %v16 = vld [vmem:[%s2] sm:$0xff]
  %s17 = sld [smem:[#allocation2]]
  %v18 = vstv %s17
  %v19 = vmul.f32 %v16, %v18
  %s20 = sld [smem:[#allocation3]]
  %v21 = vstv %s20
  %v22 = vadd.f32 %v19, %v21
  %23 = vst [vmem:[%s3] sm:$0xff] %v22
  // Predicated region
  $region14: #{linear_forward_pallas.1} parent=0 // pred_check
    _
  $region15: #{linear_forward_pallas.1} parent=0 // pred_check_branch
    %25 = sbr.rel (0) target = $region17
  $region16: #{linear_forward_pallas.1} parent=0 // pred_region
    _
  $region17: #{linear_forward_pallas.1} parent=0 // pred_fallthru
    _
  // Predicated region
  $region18: #{linear_forward_pallas.1} parent=0 // pred_check
    _
  $region19: #{linear_forward_pallas.1} parent=0 // pred_check_branch
    %27 = sbr.rel (0) target = $region21
  $region20: #{linear_forward_pallas.1} parent=0 // pred_region
    _
  $region21: #{linear_forward_pallas.1} parent=0 // pred_fallthru
    _

</llo_original>
